<compile_context>
chip_gen: v7x
topology: tpu7x:2x2x1
jax: 0.10.0
libtpu: 0.0.40
codegen_flags: <defaults>
</compile_context>

<pallas_src>
import re

import numpy as np
import jax
import jax.numpy as jnp
from jax.experimental import pallas as pl
from jax.experimental.pallas import tpu as pltpu


# ----------------------------------------------------------------------------
# Chip / VMEM introspection
# ----------------------------------------------------------------------------
def _chip_generation():
    """Best-effort TPU generation (4/5/6/7/...) from the device kind string."""
    try:
        kind = jax.devices()[0].device_kind.lower()
    except Exception:
        return None
    m = re.search(r"\d+", kind)
    if m:
        try:
            return int(m.group(0))
        except ValueError:
            return None
    return None


def _vmem_physical_bytes():
    """Physical per-core VMEM; get_tpu_info first, device_kind second."""
    try:
        v = int(pltpu.get_tpu_info().vmem_capacity_bytes)
        if v > 0:
            return v
    except Exception:
        pass
    gen = _chip_generation()
    if gen is not None and gen >= 7:
        return 64 << 20          # v7x: 64 MiB per TensorCore
    if gen is not None and gen in (4, 5, 6):
        return 128 << 20         # v4/v5e/v6e: 128 MiB
    return 64 << 20              # unknown: conservative


# ----------------------------------------------------------------------------
# Tile selection / VMEM accounting
# ----------------------------------------------------------------------------
def _tile_vmem_bytes(N, bB, tF, acc_in_out):
    """Pipeline buffers + in-kernel live intermediates for one grid step."""
    pipe = 2 * (4 + 4) * bB * N * tF          # double-buffered f32 x + out tiles
    live = (4 + 2) * bB * N * tF              # h (f32) + x_bf (bf16)
    if not acc_in_out:
        live += 4 * bB * N * tF               # local f32 accumulator
    return pipe + live


def _choose_tiles(N, F, B, budget_bytes, prefer_256, acc_in_out):
    """Pick (bB, tF): batch block and lane-aligned feature tile."""
    if F % 128 == 0:
        tf_cands = [t for t in range(128, F + 1, 128) if F % t == 0]
    else:
        tf_cands = [F]                        # full-extent block is always legal
    if N < 256:
        bb_cands = [d for d in range(1, B + 1) if B % d == 0]
    else:
        bb_cands = [1]

    fits = [(bB, tF)
            for bB in bb_cands for tF in tf_cands
            if _tile_vmem_bytes(N, bB, tF, acc_in_out) <= budget_bytes]
    if not fits:
        # Nothing fits the budget: fall back to the smallest legal block.
        return 1, (tf_cands[0] if F % 128 == 0 else F)

    if N < 128:
        # Tiny graphs: per-step matmul is negligible, minimize grid steps.
        return max(fits, key=lambda c: (c[0] * c[1], c[1]))

    max_steps = max((B // bB) * (F // tF) for (bB, tF) in fits)
    min_steps = min(8, max_steps)             # >= 4 steps per v7x core

    def key(c):
        bB, tF = c
        steps = (B // bB) * (F // tF)
        aligned = (tF % 256 == 0) if prefer_256 else True
        return (steps >= min_steps, aligned, bB * tF, tF)

    return max(fits, key=key)


# ----------------------------------------------------------------------------
# Kernel
# ----------------------------------------------------------------------------
def _make_gpr_kernel(K, bB, tF, n_chunks, acc_in_out):
    chunk = tF // n_chunks

    def gpr_kernel(temp_ref, a_ref, x_ref, o_ref):
        # temp_ref: SMEM (K+1,)      f32
        # a_ref:    VMEM (N, N)      bf16 (constant index map -> DMA'd once)
        # x_ref:    VMEM (bB, N, tF) f32
        # o_ref:    VMEM (bB, N, tF) f32
        a = a_ref[...]                                    # bf16 (N, N)

        for b in range(bB):              # static unroll over packed batch elems
            for c in range(n_chunks):    # static unroll over independent halves
                if n_chunks == 1:
                    x_f32 = x_ref[b]
                else:
                    x_f32 = x_ref[b, :, pl.ds(c * chunk, chunk)]
                x_bf = x_f32.astype(jnp.bfloat16)

                def store(val, b=b, c=c):
                    if n_chunks == 1:
                        o_ref[b] = val
                    else:
                        o_ref[b, :, pl.ds(c * chunk, chunk)] = val

                def load_out(b=b, c=c):
                    if n_chunks == 1:
                        return o_ref[b]
                    return o_ref[b, :, pl.ds(c * chunk, chunk)]

                if acc_in_out:
                    # v7x: accumulate in the output pipeline buffer (saves an
                    # N*tF f32 live value under 64 MiB/TC VMEM; the extra
                    # vst/vld per hop hides under the MXU).
                    store(temp_ref[0] * x_f32)
                    for k in range(K):
                        h = jnp.dot(a, x_bf,
                                    preferred_element_type=jnp.float32)
                        store(load_out() + temp_ref[k + 1] * h)
                        if k + 1 < K:
                            x_bf = h.astype(jnp.bfloat16)
                else:
                    out = temp_ref[0] * x_f32             # k = 0 term, exact f32
                    for k in range(K):
                        h = jnp.dot(a, x_bf,
                                    preferred_element_type=jnp.float32)
                        out = out + temp_ref[k + 1] * h
                        if k + 1 < K:
                            x_bf = h.astype(jnp.bfloat16)
                    store(out)

    return gpr_kernel


def _build_pallas_call(kernel, B, N, F, bB, tF, vmem_limit, cost,
                       single_buffer_a):
    nB, nF = B // bB, F // tF
    if single_buffer_a:
        a_spec = pl.BlockSpec((N, N), lambda b, f: (0, 0),
                              pipeline_mode=pl.Buffered(1))
    else:
        a_spec = pl.BlockSpec((N, N), lambda b, f: (0, 0))
    return pl.pallas_call(
        kernel,
        out_shape=jax.ShapeDtypeStruct((B, N, F), jnp.float32),
        grid_spec=pltpu.PrefetchScalarGridSpec(
            num_scalar_prefetch=0,
            grid=(nB, nF),
            in_specs=[
                pl.BlockSpec(memory_space=pltpu.MemorySpace.SMEM),   # temp
                a_spec,                                              # A_hat
                pl.BlockSpec((bB, N, tF), lambda b, f: (b, 0, f)),   # x block
            ],
            out_specs=pl.BlockSpec((bB, N, tF), lambda b, f: (b, 0, f)),
        ),
        compiler_params=pltpu.CompilerParams(
            dimension_semantics=("parallel", "parallel"),
            vmem_limit_bytes=vmem_limit,
        ),
        cost_estimate=cost,
    )


# ----------------------------------------------------------------------------
# Wrapper
# ----------------------------------------------------------------------------
def gpr_prop_forward(x, a_hat, temp, K: int):
    """x: (B, N, T, D) f32, a_hat: (N, N), temp: (K+1,)."""
    B, N, T, D = x.shape
    F = T * D

    x_flat = x.reshape(B, N, F).astype(jnp.float32)
    a_bf = a_hat.astype(jnp.bfloat16)       # MXU-ready, halves A VMEM footprint
    temp_f32 = temp.astype(jnp.float32)

    phys_vmem = _vmem_physical_bytes()
    gen = _chip_generation()
    acc_in_out = (gen is not None and gen >= 7)       # v7x: accumulate in o_ref
    prefer_256 = (gen is None) or (gen >= 6)          # 2x256 MXU on v6e/v7x

    # Budget: A (bf16, conservatively counted as double-buffered even if the
    # single-buffer attempt below succeeds) + tiles + intermediates must fit
    # physical VMEM minus a reserve for compiler internals.
    a_pipe_bytes = 2 * N * N * 2
    reserve = 16 << 20
    tile_budget = max(phys_vmem - reserve - a_pipe_bytes, 4 << 20)
    bB, tF = _choose_tiles(N, F, B, tile_budget, prefer_256, acc_in_out)

    tile_bytes = _tile_vmem_bytes(N, bB, tF, acc_in_out)
    vmem_needed = a_pipe_bytes + tile_bytes
    vmem_cap = max(phys_vmem - reserve, 16 << 20)
    vmem_limit = int(min(max(vmem_needed + (8 << 20), 16 << 20), vmem_cap))

    # Two independent column halves for moderate N so cast/axpy overlaps the
    # next hop's matmul (skipped for tiny graphs, where the bB loop already
    # provides independent chains, and for huge N where it is negligible).
    split_cols = (bB == 1) and (128 <= N <= 1024) and (tF % 256 == 0)
    n_chunks = 2 if split_cols else 1

    kernel = _make_gpr_kernel(K, bB, tF, n_chunks, acc_in_out)

    cost = pl.CostEstimate(
        flops=2 * K * B * N * N * F,
        transcendentals=0,
        bytes_accessed=8 * B * N * F + 2 * N * N + 4 * (K + 1),
    )

    def run(single_buffer_a):
        call = _build_pallas_call(kernel, B, N, F, bB, tF, vmem_limit, cost,
                                  single_buffer_a)
        return call(temp_f32, a_bf, x_flat)

    # Single-buffering A only pays off when A is big or VMEM is tight (v7x);
    # keep a safe fallback to the known-good double-buffered spec.
    attempt_single_a = (gen is not None and gen >= 7) or (a_pipe_bytes > (4 << 20))
    if attempt_single_a:
        try:
            out_flat = jax.block_until_ready(run(True))
        except Exception:
            out_flat = run(False)
    else:
        out_flat = run(False)

    return out_flat.reshape(B, N, T, D)


# ----------------------------------------------------------------------------
# Parameter init / reference
# ----------------------------------------------------------------------------
def init_temp(K: int, alpha: float = 0.1):
    # Deterministic synthetic init mirroring __init__:
    #   uniform(-bound, bound, K+1) normalized by sum(|.|)
    bound = np.sqrt(3.0 / (K + 1))
    key = jax.random.PRNGKey(123)
    temp = jax.random.uniform(key, (K + 1,), minval=-bound, maxval=bound,
                              dtype=jnp.float32)
    temp = temp / jnp.sum(jnp.abs(temp))
    return temp


def reference_forward(x, a_hat, temp, K: int):
    # Pure-JAX f32 reference of the PyTorch forward, for verification.
    B, N, T, D = x.shape
    xf = x.reshape(B, N, T * D)
    out = temp[0] * xf
    cur = xf
    for k in range(K):
        cur = jnp.einsum("ij,bjf->bif", a_hat, cur)
        out = out + temp[k + 1] * cur
    return out.reshape(B, N, T, D)


if __name__ == "__main__":
    K = 4
    B, N, T, D = 2, 16, 8, 32  # F = T*D = 256 (lane-aligned)

    key = jax.random.PRNGKey(0)
    kx, ka = jax.random.split(key)

    x = jax.random.normal(kx, (B, N, T, D), dtype=jnp.float32)

    # Deterministic symmetric row-normalized adjacency-like matrix.
    a_raw = jax.random.uniform(ka, (N, N), dtype=jnp.float32)
    a_sym = 0.5 * (a_raw + a_raw.T)
    a_hat = a_sym / jnp.sum(a_sym, axis=1, keepdims=True)

    temp = init_temp(K)

    out = gpr_prop_forward(x, a_hat, temp, K)
    out = jax.block_until_ready(out)

    ref = reference_forward(x, a_hat, temp, K)
    # bf16 MXU operands (with f32 accumulation) => looser tolerance vs f32 ref.
    np.testing.assert_allclose(np.asarray(out), np.asarray(ref),
                               rtol=2e-2, atol=2e-2)

    print("KERNEL_OK")
</pallas_src>

<mosaic_0001>
module attributes {stable_mosaic.version = 11 : i64} {
  func.func @gpr_kernel(%arg0: i32, %arg1: i32, %arg2: memref<5xf32, #tpu.memory_space<smem>>, %arg3: memref<16x16xbf16, #tpu.memory_space<vmem>>, %arg4: memref<2x16x256xf32, #tpu.memory_space<vmem>>, %arg5: memref<2x16x256xf32, #tpu.memory_space<vmem>>) attributes {dimension_semantics = [#tpu.dimension_semantics<parallel>, #tpu.dimension_semantics<parallel>], iteration_bounds = array<i64: 1, 1>, scalar_prefetch = 0 : i64, scratch_operands = 0 : i64, tpu.core_type = #tpu.core_type<tc>, window_params = [{transform_indices = @transform_0, window_bounds = array<i64: 5>}, {pipeline_mode = #tpu.pipeline_mode<synchronous>, transform_indices = @transform_1, window_bounds = array<i64: 16, 16>}, {transform_indices = @transform_2, window_bounds = array<i64: 2, 16, 256>}, {transform_indices = @transform_3, window_bounds = array<i64: 2, 16, 256>}]} {
    %c0 = arith.constant 0 : index
    %c0_0 = arith.constant 0 : index
    %0 = vector.load %arg3[%c0, %c0_0] : memref<16x16xbf16, #tpu.memory_space<vmem>>, vector<16x16xbf16>
    %c0_1 = arith.constant 0 : index
    %c0_2 = arith.constant 0 : index
    %c0_3 = arith.constant 0 : index
    %1 = vector.load %arg4[%c0_1, %c0_2, %c0_3] : memref<2x16x256xf32, #tpu.memory_space<vmem>>, vector<1x16x256xf32>
    %2 = vector.shape_cast %1 : vector<1x16x256xf32> to vector<16x256xf32>
    %3 = arith.truncf %2 : vector<16x256xf32> to vector<16x256xbf16>
    %c0_4 = arith.constant 0 : index
    %4 = memref.load %arg2[%c0_4] : memref<5xf32, #tpu.memory_space<smem>>
    %5 = vector.broadcast %4 : f32 to vector<16x256xf32>
    %6 = arith.mulf %5, %2 : vector<16x256xf32>
    %cst = arith.constant dense<0.000000e+00> : vector<16x256xf32>
    %7 = tpu.matmul %0, %3, %cst {dimension_numbers = #tpu.dot_dimension_numbers<[1], [0], [0], [1], [0, 0, 1, 1], [], []>} : vector<16x16xbf16>, vector<16x256xbf16>, vector<16x256xf32> -> vector<16x256xf32>
    %c1 = arith.constant 1 : index
    %8 = memref.load %arg2[%c1] : memref<5xf32, #tpu.memory_space<smem>>
    %9 = vector.broadcast %8 : f32 to vector<16x256xf32>
    %10 = arith.mulf %9, %7 : vector<16x256xf32>
    %11 = arith.addf %6, %10 : vector<16x256xf32>
    %12 = arith.truncf %7 : vector<16x256xf32> to vector<16x256xbf16>
    %cst_5 = arith.constant dense<0.000000e+00> : vector<16x256xf32>
    %13 = tpu.matmul %0, %12, %cst_5 {dimension_numbers = #tpu.dot_dimension_numbers<[1], [0], [0], [1], [0, 0, 1, 1], [], []>} : vector<16x16xbf16>, vector<16x256xbf16>, vector<16x256xf32> -> vector<16x256xf32>
    %c2 = arith.constant 2 : index
    %14 = memref.load %arg2[%c2] : memref<5xf32, #tpu.memory_space<smem>>
    %15 = vector.broadcast %14 : f32 to vector<16x256xf32>
    %16 = arith.mulf %15, %13 : vector<16x256xf32>
    %17 = arith.addf %11, %16 : vector<16x256xf32>
    %18 = arith.truncf %13 : vector<16x256xf32> to vector<16x256xbf16>
    %cst_6 = arith.constant dense<0.000000e+00> : vector<16x256xf32>
    %19 = tpu.matmul %0, %18, %cst_6 {dimension_numbers = #tpu.dot_dimension_numbers<[1], [0], [0], [1], [0, 0, 1, 1], [], []>} : vector<16x16xbf16>, vector<16x256xbf16>, vector<16x256xf32> -> vector<16x256xf32>
    %c3 = arith.constant 3 : index
    %20 = memref.load %arg2[%c3] : memref<5xf32, #tpu.memory_space<smem>>
    %21 = vector.broadcast %20 : f32 to vector<16x256xf32>
    %22 = arith.mulf %21, %19 : vector<16x256xf32>
    %23 = arith.addf %17, %22 : vector<16x256xf32>
    %24 = arith.truncf %19 : vector<16x256xf32> to vector<16x256xbf16>
    %cst_7 = arith.constant dense<0.000000e+00> : vector<16x256xf32>
    %25 = tpu.matmul %0, %24, %cst_7 {dimension_numbers = #tpu.dot_dimension_numbers<[1], [0], [0], [1], [0, 0, 1, 1], [], []>} : vector<16x16xbf16>, vector<16x256xbf16>, vector<16x256xf32> -> vector<16x256xf32>
    %c4 = arith.constant 4 : index
    %26 = memref.load %arg2[%c4] : memref<5xf32, #tpu.memory_space<smem>>
    %27 = vector.broadcast %26 : f32 to vector<16x256xf32>
    %28 = arith.mulf %27, %25 : vector<16x256xf32>
    %29 = arith.addf %23, %28 : vector<16x256xf32>
    %c0_8 = arith.constant 0 : index
    %c0_9 = arith.constant 0 : index
    %c0_10 = arith.constant 0 : index
    %30 = vector.load %arg5[%c0_8, %c0_9, %c0_10] : memref<2x16x256xf32, #tpu.memory_space<vmem>>, vector<1x16x256xf32>
    %31 = vector.shape_cast %30 : vector<1x16x256xf32> to vector<16x256xf32>
    %32 = vector.shape_cast %29 : vector<16x256xf32> to vector<1x16x256xf32>
    tpu.vector_store %arg5[%c0_8, %c0_9, %c0_10], %32 {strides = array<i32>} : memref<2x16x256xf32, #tpu.memory_space<vmem>>, vector<1x16x256xf32>,
    %c1_11 = arith.constant 1 : index
    %c0_12 = arith.constant 0 : index
    %c0_13 = arith.constant 0 : index
    %33 = vector.load %arg4[%c1_11, %c0_12, %c0_13] : memref<2x16x256xf32, #tpu.memory_space<vmem>>, vector<1x16x256xf32>
    %34 = vector.shape_cast %33 : vector<1x16x256xf32> to vector<16x256xf32>
    %35 = arith.truncf %34 : vector<16x256xf32> to vector<16x256xbf16>
    %c0_14 = arith.constant 0 : index
    %36 = memref.load %arg2[%c0_14] : memref<5xf32, #tpu.memory_space<smem>>
    %37 = vector.broadcast %36 : f32 to vector<16x256xf32>
    %38 = arith.mulf %37, %34 : vector<16x256xf32>
    %cst_15 = arith.constant dense<0.000000e+00> : vector<16x256xf32>
    %39 = tpu.matmul %0, %35, %cst_15 {dimension_numbers = #tpu.dot_dimension_numbers<[1], [0], [0], [1], [0, 0, 1, 1], [], []>} : vector<16x16xbf16>, vector<16x256xbf16>, vector<16x256xf32> -> vector<16x256xf32>
    %c1_16 = arith.constant 1 : index
    %40 = memref.load %arg2[%c1_16] : memref<5xf32, #tpu.memory_space<smem>>
    %41 = vector.broadcast %40 : f32 to vector<16x256xf32>
    %42 = arith.mulf %41, %39 : vector<16x256xf32>
    %43 = arith.addf %38, %42 : vector<16x256xf32>
    %44 = arith.truncf %39 : vector<16x256xf32> to vector<16x256xbf16>
    %cst_17 = arith.constant dense<0.000000e+00> : vector<16x256xf32>
    %45 = tpu.matmul %0, %44, %cst_17 {dimension_numbers = #tpu.dot_dimension_numbers<[1], [0], [0], [1], [0, 0, 1, 1], [], []>} : vector<16x16xbf16>, vector<16x256xbf16>, vector<16x256xf32> -> vector<16x256xf32>
    %c2_18 = arith.constant 2 : index
    %46 = memref.load %arg2[%c2_18] : memref<5xf32, #tpu.memory_space<smem>>
    %47 = vector.broadcast %46 : f32 to vector<16x256xf32>
    %48 = arith.mulf %47, %45 : vector<16x256xf32>
    %49 = arith.addf %43, %48 : vector<16x256xf32>
    %50 = arith.truncf %45 : vector<16x256xf32> to vector<16x256xbf16>
    %cst_19 = arith.constant dense<0.000000e+00> : vector<16x256xf32>
    %51 = tpu.matmul %0, %50, %cst_19 {dimension_numbers = #tpu.dot_dimension_numbers<[1], [0], [0], [1], [0, 0, 1, 1], [], []>} : vector<16x16xbf16>, vector<16x256xbf16>, vector<16x256xf32> -> vector<16x256xf32>
    %c3_20 = arith.constant 3 : index
    %52 = memref.load %arg2[%c3_20] : memref<5xf32, #tpu.memory_space<smem>>
    %53 = vector.broadcast %52 : f32 to vector<16x256xf32>
    %54 = arith.mulf %53, %51 : vector<16x256xf32>
    %55 = arith.addf %49, %54 : vector<16x256xf32>
    %56 = arith.truncf %51 : vector<16x256xf32> to vector<16x256xbf16>
    %cst_21 = arith.constant dense<0.000000e+00> : vector<16x256xf32>
    %57 = tpu.matmul %0, %56, %cst_21 {dimension_numbers = #tpu.dot_dimension_numbers<[1], [0], [0], [1], [0, 0, 1, 1], [], []>} : vector<16x16xbf16>, vector<16x256xbf16>, vector<16x256xf32> -> vector<16x256xf32>
    %c4_22 = arith.constant 4 : index
    %58 = memref.load %arg2[%c4_22] : memref<5xf32, #tpu.memory_space<smem>>
    %59 = vector.broadcast %58 : f32 to vector<16x256xf32>
    %60 = arith.mulf %59, %57 : vector<16x256xf32>
    %61 = arith.addf %55, %60 : vector<16x256xf32>
    %c1_23 = arith.constant 1 : index
    %c0_24 = arith.constant 0 : index
    %c0_25 = arith.constant 0 : index
    %62 = vector.load %arg5[%c1_23, %c0_24, %c0_25] : memref<2x16x256xf32, #tpu.memory_space<vmem>>, vector<1x16x256xf32>
    %63 = vector.shape_cast %62 : vector<1x16x256xf32> to vector<16x256xf32>
    %64 = vector.shape_cast %61 : vector<16x256xf32> to vector<1x16x256xf32>
    tpu.vector_store %arg5[%c1_23, %c0_24, %c0_25], %64 {strides = array<i32>} : memref<2x16x256xf32, #tpu.memory_space<vmem>>, vector<1x16x256xf32>,
    return
  }
  func.func @transform_0(%arg0: i32, %arg1: i32) -> i32 {
    %c0_i32 = arith.constant 0 : i32
    %c0_i32_0 = arith.constant 0 : i32
    return %c0_i32 : i32
  }
  func.func @transform_1(%arg0: i32, %arg1: i32) -> (i32, i32) {
    %c0_i32 = arith.constant 0 : i32
    %c0_i32_0 = arith.constant 0 : i32
    %c0_i32_1 = arith.constant 0 : i32
    return %c0_i32, %c0_i32_0 : i32, i32
  }
  func.func @transform_2(%arg0: i32, %arg1: i32) -> (i32, i32, i32) {
    %c0_i32 = arith.constant 0 : i32
    %c0_i32_0 = arith.constant 0 : i32
    return %arg0, %c0_i32, %arg1 : i32, i32, i32
  }
  func.func @transform_3(%arg0: i32, %arg1: i32) -> (i32, i32, i32) {
    %c0_i32 = arith.constant 0 : i32
    %c0_i32_0 = arith.constant 0 : i32
    return %arg0, %c0_i32, %arg1 : i32, i32, i32
  }
}

</mosaic_0001>

<llo_original>
// kernel: tpu_custom_call.1
$region0: #{tpu_custom_call.1}
  #allocation0 [shape = 'u32[]', space=smem, size = 0x4, offset = 0x4, fixed_abs, tag = 'smem constant byte address 0x4 - core index']
  #allocation1 [shape = 'u32[144,128]{1,0:T(1,128)}', space=vmem, size = 0x12000, scoped, tag = 'internal scratch']
  %s0 = inlined_call_operand.hbm [shape: f32[5], index: 0, kind: input, shape index: {}]
  %s1 = inlined_call_operand.hbm [shape: bf16[16,16], index: 1, kind: input, shape index: {}]
  %s2 = inlined_call_operand.hbm [shape: f32[2,16,256], index: 2, kind: input, shape index: {}]
  %s3 = inlined_call_operand.hbm [shape: f32[2,16,256], index: 3, kind: output, shape index: {}]
  %s4 = sld [smem:[#allocation0]]
  $region34: #{tpu_custom_call.1} parent=0
    _
  %s6 = ssub.s32 1, %s4
  %s7 = scalar_select 0, %s6, %s4
  $region1: #{tpu_custom_call.1} parent=0
    #allocation2 [shape = 'u8[512]{0}', space=smem, size = 0x200, scoped, tag = 'input window, operand 0, single buffered']
    #allocation3 [shape = 's32[1]{0}', space=sflag, size = 0x4, scoped, tag = 'scoped memory for tpu_custom_call.1']
    #allocation4 [shape = 's32[1]{0}', space=sflag, size = 0x4, scoped, tag = 'scoped memory for tpu_custom_call.1']
    #allocation5 [shape = 's32[1]{0}', space=sflag, size = 0x4, scoped, tag = 'scoped memory for tpu_custom_call.1']
    #allocation6 [shape = 'u8[4096]{0}', space=vmem, size = 0x1000, scoped, tag = 'input window, operand 1, single buffered']
    #allocation7 [shape = 'u8[32768]{0}', space=vmem, size = 0x8000, scoped, tag = 'input window, operand 2, single buffered']
    #allocation8 [shape = 's32[1]{0}', space=sflag, size = 0x4, scoped, tag = 'scoped memory for tpu_custom_call.1']
    #allocation9 [shape = 'u8[32768]{0}', space=vmem, size = 0x8000, scoped, tag = 'output window, operand 0, single buffered']
    %8 = vsyncpa [#allocation5], 0
    %9 = vsyncpa [#allocation3], 0
    %10 = vsyncpa [#allocation8], 0
    %11 = vsyncpa [#allocation4], 0
    // Predicated region
    $region2: #{tpu_custom_call.1} parent=1 // pred_check
      _
    $region3: #{tpu_custom_call.1} parent=1 // pred_check_branch
      %13 = sbr.rel (0) target = $region5
    $region4: #{tpu_custom_call.1} parent=1 // pred_region
      %s15 = ssub.s32 16, 16
      %16 = vsyncadd [#allocation5], %s15
      %19 = dma.hbm_to_smem %s0, 16, [#allocation2], [#allocation5]
    $region5: #{tpu_custom_call.1} parent=1 // pred_fallthru
      _
    // Predicated region
    $region6: #{tpu_custom_call.1} parent=1 // pred_check
      _
    $region7: #{tpu_custom_call.1} parent=1 // pred_check_branch
      %21 = sbr.rel (0) target = $region9
    $region8: #{tpu_custom_call.1} parent=1 // pred_region
      %s23 = ssub.s32 128, 128
      %24 = vsyncadd [#allocation3], %s23
      %s25 = sshll.u32 [#allocation6], 4
      %s26 = int_to_ptr.vmem [resolvable:$true] %s25
      %31 = dma.hbm_to_vmem [thread:$0]  %s1, 128, %s26, [#allocation3], 64, 64, 4
    $region9: #{tpu_custom_call.1} parent=1 // pred_fallthru
      _
    // Predicated region
    $region10: #{tpu_custom_call.1} parent=1 // pred_check
      _
    $region11: #{tpu_custom_call.1} parent=1 // pred_check_branch
      %33 = sbr.rel (0) target = $region13
    $region12: #{tpu_custom_call.1} parent=1 // pred_region
      %s35 = ssub.s32 1024, 1024
      %36 = vsyncadd [#allocation8], %s35
      %s37 = sshll.u32 [#allocation7], 4
      %s38 = int_to_ptr.vmem [resolvable:$true] %s37
      %43 = dma.hbm_to_vmem [thread:$0]  %s2, 1024, %s38, [#allocation8], 256, 256, 16
    $region13: #{tpu_custom_call.1} parent=1 // pred_fallthru
      _
    // Predicated region
    $region14: #{tpu_custom_call.1} parent=1 // pred_check
      _
    $region15: #{tpu_custom_call.1} parent=1 // pred_check_branch
      %45 = sbr.rel (0) target = $region17
    $region16: #{tpu_custom_call.1} parent=1 // pred_region
      %46 = dma.done [#allocation5], 16
    $region17: #{tpu_custom_call.1} parent=1 // pred_fallthru
      _
    // Predicated region
    $region18: #{tpu_custom_call.1} parent=1 // pred_check
      _
    $region19: #{tpu_custom_call.1} parent=1 // pred_check_branch
      %48 = sbr.rel (0) target = $region21
    $region20: #{tpu_custom_call.1} parent=1 // pred_region
      %49 = dma.done [#allocation3], 128
    $region21: #{tpu_custom_call.1} parent=1 // pred_fallthru
      _
    // Predicated region
    $region22: #{tpu_custom_call.1} parent=1 // pred_check
      _
    $region23: #{tpu_custom_call.1} parent=1 // pred_check_branch
      %51 = sbr.rel (0) target = $region25
    $region24: #{tpu_custom_call.1} parent=1 // pred_region
      %52 = dma.done [#allocation8], 1024
    $region25: #{tpu_custom_call.1} parent=1 // pred_fallthru
      _
    %53 = sfence
    %v55 = vld [vmem:[#allocation6] sm:$0xf]
    %v56 = vld [vmem:[#allocation6 + $0x4] sm:$0xf]
    %v57 = vld [vmem:[#allocation7] sm:$0xff]
    %v58 = vld [vmem:[#allocation7 + $0x8] sm:$0xff]
    %v59 = vld [vmem:[#allocation7 + $0x10] sm:$0xff]
    %v60 = vld [vmem:[#allocation7 + $0x18] sm:$0xff]
    %v61 = vpack.c.bf16 %v59, %v57
    %v62 = vpack.c.bf16 %v60, %v58
    %s63 = sld [smem:[#allocation2]]
    %v64 = vstv %s63
    %v65 = vmul.f32 %v64, %v57
    %v66 = vmul.f32 %v64, %v58
    %v67 = vmul.f32 %v64, %v59
    %v68 = vmul.f32 %v64, %v60
    %v71 = vunpack.c.l.b16 %v55
    %v72 = vunpack.c.l.b16 %v56
    %v73 = vpack.c.b16 %v72, %v71
    %vm74 = vcmask 130048
    %v76 = vsel %vm74, %v73, 0
    %78 = vmatprep.subr.bf16.mxu0 %v62
    %79 = vmatpush1.bf16.msra.mxu0 %v61
    %80 = vmatprep.subr.bf16.mxu0 0
    %81 = vmatpush1.bf16.msra.mxu0 0
    %82 = vmatprep.subr.bf16.mxu0 0
    %83 = vmatpush1.bf16.msra.mxu0 0
    %84 = vmatprep.subr.bf16.mxu0 0
    %85 = vmatpush1.bf16.msra.mxu0 0
    %86 = vmatprep.subr.bf16.mxu0 0
    %87 = vmatpush1.bf16.msra.mxu0 0
    %88 = vmatprep.subr.bf16.mxu0 0
    %89 = vmatpush1.bf16.msra.mxu0 0
    %90 = vmatprep.subr.bf16.mxu0 0
    %91 = vmatpush1.bf16.msra.mxu0 0
    %92 = vmatprep.subr.bf16.mxu0 0
    %93 = vmatpush1.bf16.msra.mxu0 0
    %94 = vmatprep.subr.bf16.mxu0 0
    %95 = vmatpush1.bf16.msra.mxu0 0
    %96 = vmatprep.subr.bf16.mxu0 0
    %97 = vmatpush1.bf16.msra.mxu0 0
    %98 = vmatprep.subr.bf16.mxu0 0
    %99 = vmatpush1.bf16.msra.mxu0 0
    %100 = vmatprep.subr.bf16.mxu0 0
    %101 = vmatpush1.bf16.msra.mxu0 0
    %102 = vmatprep.subr.bf16.mxu0 0
    %103 = vmatpush1.bf16.msra.mxu0 0
    %104 = vmatprep.subr.bf16.mxu0 0
    %105 = vmatpush1.bf16.msra.mxu0 0
    %106 = vmatprep.subr.bf16.mxu0 0
    %107 = vmatpush1.bf16.msra.mxu0 0
    %108 = vmatprep.subr.bf16.mxu0 0
    %109 = vmatpush1.bf16.msra.mxu0 0
    %110 = vmatprep.mubr.bf16.mxu0 0
    %111 = vmatmul.mubr.bf16.gmra.mrb[0].mxu0 %v76
    %v112 = vpop.f32.mrb[0].mxu0
    %v113 = vadd.f32 0.0, %v112
    %v114 = vpop.f32.mrb[0].mxu0
    %v115 = vadd.f32 0.0, %v114
    %v116 = vpop.f32.mrb[0].mxu0
    %v117 = vadd.f32 0.0, %v116
    %v118 = vpop.f32.mrb[0].mxu0
    %v119 = vadd.f32 0.0, %v118
    %120 = vdwg.mxu0
    %s121 = sld [smem:[#allocation2 + $0x1]]
    %v122 = vstv %s121
    %v123 = vmul.f32 %v122, %v113
    %v124 = vmul.f32 %v122, %v115
    %v125 = vmul.f32 %v122, %v117
    %v126 = vmul.f32 %v122, %v119
    %v127 = vadd.f32 %v65, %v123
    %v128 = vadd.f32 %v66, %v124
    %v129 = vadd.f32 %v67, %v125
    %v130 = vadd.f32 %v68, %v126
    %v131 = vpack.c.bf16 %v117, %v113
    %v132 = vpack.c.bf16 %v119, %v115
    %133 = vmatprep.subr.bf16.mxu0 %v132
    %134 = vmatpush1.bf16.msra.mxu0 %v131
    %135 = vmatprep.subr.bf16.mxu0 0
    %136 = vmatpush1.bf16.msra.mxu0 0
    %137 = vmatprep.subr.bf16.mxu0 0
    %138 = vmatpush1.bf16.msra.mxu0 0
    %139 = vmatprep.subr.bf16.mxu0 0
    %140 = vmatpush1.bf16.msra.mxu0 0
    %141 = vmatprep.subr.bf16.mxu0 0
    %142 = vmatpush1.bf16.msra.mxu0 0
    %143 = vmatprep.subr.bf16.mxu0 0
    %144 = vmatpush1.bf16.msra.mxu0 0
    %145 = vmatprep.subr.bf16.mxu0 0
    %146 = vmatpush1.bf16.msra.mxu0 0
    %147 = vmatprep.subr.bf16.mxu0 0
    %148 = vmatpush1.bf16.msra.mxu0 0
    %149 = vmatprep.subr.bf16.mxu0 0
    %150 = vmatpush1.bf16.msra.mxu0 0
    %151 = vmatprep.subr.bf16.mxu0 0
    %152 = vmatpush1.bf16.msra.mxu0 0
    %153 = vmatprep.subr.bf16.mxu0 0
    %154 = vmatpush1.bf16.msra.mxu0 0
    %155 = vmatprep.subr.bf16.mxu0 0
    %156 = vmatpush1.bf16.msra.mxu0 0
    %157 = vmatprep.subr.bf16.mxu0 0
    %158 = vmatpush1.bf16.msra.mxu0 0
    %159 = vmatprep.subr.bf16.mxu0 0
    %160 = vmatpush1.bf16.msra.mxu0 0
    %161 = vmatprep.subr.bf16.mxu0 0
    %162 = vmatpush1.bf16.msra.mxu0 0
    %163 = vmatprep.subr.bf16.mxu0 0
    %164 = vmatpush1.bf16.msra.mxu0 0
    %165 = vmatprep.mubr.bf16.mxu0 0
    %166 = vmatmul.mubr.bf16.gmra.mrb[0].mxu0 %v76
    %v167 = vpop.f32.mrb[0].mxu0
    %v168 = vadd.f32 0.0, %v167
    %v169 = vpop.f32.mrb[0].mxu0
    %v170 = vadd.f32 0.0, %v169
    %v171 = vpop.f32.mrb[0].mxu0
    %v172 = vadd.f32 0.0, %v171
    %v173 = vpop.f32.mrb[0].mxu0
    %v174 = vadd.f32 0.0, %v173
    %175 = vdwg.mxu0
    %s176 = sld [smem:[#allocation2 + $0x2]]
    %v177 = vstv %s176
    %v178 = vmul.f32 %v177, %v168
    %v179 = vmul.f32 %v177, %v170
    %v180 = vmul.f32 %v177, %v172
    %v181 = vmul.f32 %v177, %v174
    %v182 = vadd.f32 %v127, %v178
    %v183 = vadd.f32 %v128, %v179
    %v184 = vadd.f32 %v129, %v180
    %v185 = vadd.f32 %v130, %v181
    %v186 = vpack.c.bf16 %v172, %v168
    %v187 = vpack.c.bf16 %v174, %v170
    %188 = vmatprep.subr.bf16.mxu0 %v187
    %189 = vmatpush1.bf16.msra.mxu0 %v186
    %190 = vmatprep.subr.bf16.mxu0 0
    %191 = vmatpush1.bf16.msra.mxu0 0
    %192 = vmatprep.subr.bf16.mxu0 0
    %193 = vmatpush1.bf16.msra.mxu0 0
    %194 = vmatprep.subr.bf16.mxu0 0
    %195 = vmatpush1.bf16.msra.mxu0 0
    %196 = vmatprep.subr.bf16.mxu0 0
    %197 = vmatpush1.bf16.msra.mxu0 0
    %198 = vmatprep.subr.bf16.mxu0 0
    %199 = vmatpush1.bf16.msra.mxu0 0
    %200 = vmatprep.subr.bf16.mxu0 0
    %201 = vmatpush1.bf16.msra.mxu0 0
    %202 = vmatprep.subr.bf16.mxu0 0
    %203 = vmatpush1.bf16.msra.mxu0 0
    %204 = vmatprep.subr.bf16.mxu0 0
    %205 = vmatpush1.bf16.msra.mxu0 0
    %206 = vmatprep.subr.bf16.mxu0 0
    %207 = vmatpush1.bf16.msra.mxu0 0
    %208 = vmatprep.subr.bf16.mxu0 0
    %209 = vmatpush1.bf16.msra.mxu0 0
    %210 = vmatprep.subr.bf16.mxu0 0
    %211 = vmatpush1.bf16.msra.mxu0 0
    %212 = vmatprep.subr.bf16.mxu0 0
    %213 = vmatpush1.bf16.msra.mxu0 0
    %214 = vmatprep.subr.bf16.mxu0 0
    %215 = vmatpush1.bf16.msra.mxu0 0
    %216 = vmatprep.subr.bf16.mxu0 0
    %217 = vmatpush1.bf16.msra.mxu0 0
    %218 = vmatprep.subr.bf16.mxu0 0
    %219 = vmatpush1.bf16.msra.mxu0 0
    %220 = vmatprep.mubr.bf16.mxu0 0
    %221 = vmatmul.mubr.bf16.gmra.mrb[0].mxu0 %v76
    %v222 = vpop.f32.mrb[0].mxu0
    %v223 = vadd.f32 0.0, %v222
    %v224 = vpop.f32.mrb[0].mxu0
    %v225 = vadd.f32 0.0, %v224
    %v226 = vpop.f32.mrb[0].mxu0
    %v227 = vadd.f32 0.0, %v226
    %v228 = vpop.f32.mrb[0].mxu0
    %v229 = vadd.f32 0.0, %v228
    %230 = vdwg.mxu0
    %s231 = sld [smem:[#allocation2 + $0x3]]
    %v232 = vstv %s231
    %v233 = vmul.f32 %v232, %v223
    %v234 = vmul.f32 %v232, %v225
    %v235 = vmul.f32 %v232, %v227
    %v236 = vmul.f32 %v232, %v229
    %v237 = vadd.f32 %v182, %v233
    %v238 = vadd.f32 %v183, %v234
    %v239 = vadd.f32 %v184, %v235
    %v240 = vadd.f32 %v185, %v236
    %v241 = vpack.c.bf16 %v227, %v223
    %v242 = vpack.c.bf16 %v229, %v225
    %243 = vmatprep.subr.bf16.mxu0 %v242
    %244 = vmatpush1.bf16.msra.mxu0 %v241
    %245 = vmatprep.subr.bf16.mxu0 0
    %246 = vmatpush1.bf16.msra.mxu0 0
    %247 = vmatprep.subr.bf16.mxu0 0
    %248 = vmatpush1.bf16.msra.mxu0 0
    %249 = vmatprep.subr.bf16.mxu0 0
    %250 = vmatpush1.bf16.msra.mxu0 0
    %251 = vmatprep.subr.bf16.mxu0 0
    %252 = vmatpush1.bf16.msra.mxu0 0
    %253 = vmatprep.subr.bf16.mxu0 0
    %254 = vmatpush1.bf16.msra.mxu0 0
    %255 = vmatprep.subr.bf16.mxu0 0
    %256 = vmatpush1.bf16.msra.mxu0 0
    %257 = vmatprep.subr.bf16.mxu0 0
    %258 = vmatpush1.bf16.msra.mxu0 0
    %259 = vmatprep.subr.bf16.mxu0 0
    %260 = vmatpush1.bf16.msra.mxu0 0
    %261 = vmatprep.subr.bf16.mxu0 0
    %262 = vmatpush1.bf16.msra.mxu0 0
    %263 = vmatprep.subr.bf16.mxu0 0
    %264 = vmatpush1.bf16.msra.mxu0 0
    %265 = vmatprep.subr.bf16.mxu0 0
    %266 = vmatpush1.bf16.msra.mxu0 0
    %267 = vmatprep.subr.bf16.mxu0 0
    %268 = vmatpush1.bf16.msra.mxu0 0
    %269 = vmatprep.subr.bf16.mxu0 0
    %270 = vmatpush1.bf16.msra.mxu0 0
    %271 = vmatprep.subr.bf16.mxu0 0
    %272 = vmatpush1.bf16.msra.mxu0 0
    %273 = vmatprep.subr.bf16.mxu0 0
    %274 = vmatpush1.bf16.msra.mxu0 0
    %275 = vmatprep.mubr.bf16.mxu0 0
    %276 = vmatmul.mubr.bf16.gmra.mrb[0].mxu0 %v76
    %v277 = vpop.f32.mrb[0].mxu0
    %v278 = vadd.f32 0.0, %v277
    %v279 = vpop.f32.mrb[0].mxu0
    %v280 = vadd.f32 0.0, %v279
    %v281 = vpop.f32.mrb[0].mxu0
    %v282 = vadd.f32 0.0, %v281
    %v283 = vpop.f32.mrb[0].mxu0
    %v284 = vadd.f32 0.0, %v283
    %285 = vdwg.mxu0
    %s286 = sld [smem:[#allocation2 + $0x4]]
    %v287 = vstv %s286
    %v288 = vmul.f32 %v287, %v278
    %v289 = vmul.f32 %v287, %v280
    %v290 = vmul.f32 %v287, %v282
    %v291 = vmul.f32 %v287, %v284
    %v292 = vadd.f32 %v237, %v288
    %v293 = vadd.f32 %v238, %v289
    %v294 = vadd.f32 %v239, %v290
    %v295 = vadd.f32 %v240, %v291
    %296 = vst [vmem:[#allocation9] sm:$0xff] %v292
    %297 = vst [vmem:[#allocation9 + $0x8] sm:$0xff] %v293
    %298 = vst [vmem:[#allocation9 + $0x10] sm:$0xff] %v294
    %299 = vst [vmem:[#allocation9 + $0x18] sm:$0xff] %v295
    %s300 = scalar_lea.vmem [#allocation7], 32
    %v301 = vld [vmem:[%s300] sm:$0xff]
    %v302 = vld [vmem:[%s300 + $0x8] sm:$0xff]
    %v303 = vld [vmem:[%s300 + $0x10] sm:$0xff]
    %v304 = vld [vmem:[%s300 + $0x18] sm:$0xff]
    %v305 = vpack.c.bf16 %v303, %v301
    %v306 = vpack.c.bf16 %v304, %v302
    %s307 = sld [smem:[#allocation2]]
    %v308 = vstv %s307
    %v309 = vmul.f32 %v308, %v301
    %v310 = vmul.f32 %v308, %v302
    %v311 = vmul.f32 %v308, %v303
    %v312 = vmul.f32 %v308, %v304
    %313 = vmatprep.subr.bf16.mxu0 %v306
    %314 = vmatpush1.bf16.msra.mxu0 %v305
    %315 = vmatprep.subr.bf16.mxu0 0
    %316 = vmatpush1.bf16.msra.mxu0 0
    %317 = vmatprep.subr.bf16.mxu0 0
    %318 = vmatpush1.bf16.msra.mxu0 0
    %319 = vmatprep.subr.bf16.mxu0 0
    %320 = vmatpush1.bf16.msra.mxu0 0
    %321 = vmatprep.subr.bf16.mxu0 0
    %322 = vmatpush1.bf16.msra.mxu0 0
    %323 = vmatprep.subr.bf16.mxu0 0
    %324 = vmatpush1.bf16.msra.mxu0 0
    %325 = vmatprep.subr.bf16.mxu0 0
    %326 = vmatpush1.bf16.msra.mxu0 0
    %327 = vmatprep.subr.bf16.mxu0 0
    %328 = vmatpush1.bf16.msra.mxu0 0
    %329 = vmatprep.subr.bf16.mxu0 0
    %330 = vmatpush1.bf16.msra.mxu0 0
    %331 = vmatprep.subr.bf16.mxu0 0
    %332 = vmatpush1.bf16.msra.mxu0 0
    %333 = vmatprep.subr.bf16.mxu0 0
    %334 = vmatpush1.bf16.msra.mxu0 0
    %335 = vmatprep.subr.bf16.mxu0 0
    %336 = vmatpush1.bf16.msra.mxu0 0
    %337 = vmatprep.subr.bf16.mxu0 0
    %338 = vmatpush1.bf16.msra.mxu0 0
    %339 = vmatprep.subr.bf16.mxu0 0
    %340 = vmatpush1.bf16.msra.mxu0 0
    %341 = vmatprep.subr.bf16.mxu0 0
    %342 = vmatpush1.bf16.msra.mxu0 0
    %343 = vmatprep.subr.bf16.mxu0 0
    %344 = vmatpush1.bf16.msra.mxu0 0
    %345 = vmatprep.mubr.bf16.mxu0 0
    %346 = vmatmul.mubr.bf16.gmra.mrb[0].mxu0 %v76
    %v347 = vpop.f32.mrb[0].mxu0
    %v348 = vadd.f32 0.0, %v347
    %v349 = vpop.f32.mrb[0].mxu0
    %v350 = vadd.f32 0.0, %v349
    %v351 = vpop.f32.mrb[0].mxu0
    %v352 = vadd.f32 0.0, %v351
    %v353 = vpop.f32.mrb[0].mxu0
    %v354 = vadd.f32 0.0, %v353
    %355 = vdwg.mxu0
    %s356 = sld [smem:[#allocation2 + $0x1]]
    %v357 = vstv %s356
    %v358 = vmul.f32 %v357, %v348
    %v359 = vmul.f32 %v357, %v350
    %v360 = vmul.f32 %v357, %v352
    %v361 = vmul.f32 %v357, %v354
    %v362 = vadd.f32 %v309, %v358
    %v363 = vadd.f32 %v310, %v359
    %v364 = vadd.f32 %v311, %v360
    %v365 = vadd.f32 %v312, %v361
    %v366 = vpack.c.bf16 %v352, %v348
    %v367 = vpack.c.bf16 %v354, %v350
    %368 = vmatprep.subr.bf16.mxu0 %v367
    %369 = vmatpush1.bf16.msra.mxu0 %v366
    %370 = vmatprep.subr.bf16.mxu0 0
    %371 = vmatpush1.bf16.msra.mxu0 0
    %372 = vmatprep.subr.bf16.mxu0 0
    %373 = vmatpush1.bf16.msra.mxu0 0
    %374 = vmatprep.subr.bf16.mxu0 0
    %375 = vmatpush1.bf16.msra.mxu0 0
    %376 = vmatprep.subr.bf16.mxu0 0
    %377 = vmatpush1.bf16.msra.mxu0 0
    %378 = vmatprep.subr.bf16.mxu0 0
    %379 = vmatpush1.bf16.msra.mxu0 0
    %380 = vmatprep.subr.bf16.mxu0 0
    %381 = vmatpush1.bf16.msra.mxu0 0
    %382 = vmatprep.subr.bf16.mxu0 0
    %383 = vmatpush1.bf16.msra.mxu0 0
    %384 = vmatprep.subr.bf16.mxu0 0
    %385 = vmatpush1.bf16.msra.mxu0 0
    %386 = vmatprep.subr.bf16.mxu0 0
    %387 = vmatpush1.bf16.msra.mxu0 0
    %388 = vmatprep.subr.bf16.mxu0 0
    %389 = vmatpush1.bf16.msra.mxu0 0
    %390 = vmatprep.subr.bf16.mxu0 0
    %391 = vmatpush1.bf16.msra.mxu0 0
    %392 = vmatprep.subr.bf16.mxu0 0
    %393 = vmatpush1.bf16.msra.mxu0 0
    %394 = vmatprep.subr.bf16.mxu0 0
    %395 = vmatpush1.bf16.msra.mxu0 0
    %396 = vmatprep.subr.bf16.mxu0 0
    %397 = vmatpush1.bf16.msra.mxu0 0
    %398 = vmatprep.subr.bf16.mxu0 0
    %399 = vmatpush1.bf16.msra.mxu0 0
    %400 = vmatprep.mubr.bf16.mxu0 0
    %401 = vmatmul.mubr.bf16.gmra.mrb[0].mxu0 %v76
    %v402 = vpop.f32.mrb[0].mxu0
    %v403 = vadd.f32 0.0, %v402
    %v404 = vpop.f32.mrb[0].mxu0
    %v405 = vadd.f32 0.0, %v404
    %v406 = vpop.f32.mrb[0].mxu0
    %v407 = vadd.f32 0.0, %v406
    %v408 = vpop.f32.mrb[0].mxu0
    %v409 = vadd.f32 0.0, %v408
    %410 = vdwg.mxu0
    %s411 = sld [smem:[#allocation2 + $0x2]]
    %v412 = vstv %s411
    %v413 = vmul.f32 %v412, %v403
    %v414 = vmul.f32 %v412, %v405
    %v415 = vmul.f32 %v412, %v407
    %v416 = vmul.f32 %v412, %v409
    %v417 = vadd.f32 %v362, %v413
    %v418 = vadd.f32 %v363, %v414
    %v419 = vadd.f32 %v364, %v415
    %v420 = vadd.f32 %v365, %v416
    %v421 = vpack.c.bf16 %v407, %v403
    %v422 = vpack.c.bf16 %v409, %v405
    %423 = vmatprep.subr.bf16.mxu0 %v422
    %424 = vmatpush1.bf16.msra.mxu0 %v421
    %425 = vmatprep.subr.bf16.mxu0 0
    %426 = vmatpush1.bf16.msra.mxu0 0
    %427 = vmatprep.subr.bf16.mxu0 0
    %428 = vmatpush1.bf16.msra.mxu0 0
    %429 = vmatprep.subr.bf16.mxu0 0
    %430 = vmatpush1.bf16.msra.mxu0 0
    %431 = vmatprep.subr.bf16.mxu0 0
    %432 = vmatpush1.bf16.msra.mxu0 0
    %433 = vmatprep.subr.bf16.mxu0 0
    %434 = vmatpush1.bf16.msra.mxu0 0
    %435 = vmatprep.subr.bf16.mxu0 0
    %436 = vmatpush1.bf16.msra.mxu0 0
    %437 = vmatprep.subr.bf16.mxu0 0
    %438 = vmatpush1.bf16.msra.mxu0 0
    %439 = vmatprep.subr.bf16.mxu0 0
    %440 = vmatpush1.bf16.msra.mxu0 0
    %441 = vmatprep.subr.bf16.mxu0 0
    %442 = vmatpush1.bf16.msra.mxu0 0
    %443 = vmatprep.subr.bf16.mxu0 0
    %444 = vmatpush1.bf16.msra.mxu0 0
    %445 = vmatprep.subr.bf16.mxu0 0
    %446 = vmatpush1.bf16.msra.mxu0 0
    %447 = vmatprep.subr.bf16.mxu0 0
    %448 = vmatpush1.bf16.msra.mxu0 0
    %449 = vmatprep.subr.bf16.mxu0 0
    %450 = vmatpush1.bf16.msra.mxu0 0
    %451 = vmatprep.subr.bf16.mxu0 0
    %452 = vmatpush1.bf16.msra.mxu0 0
    %453 = vmatprep.subr.bf16.mxu0 0
    %454 = vmatpush1.bf16.msra.mxu0 0
    %455 = vmatprep.mubr.bf16.mxu0 0
    %456 = vmatmul.mubr.bf16.gmra.mrb[0].mxu0 %v76
    %v457 = vpop.f32.mrb[0].mxu0
    %v458 = vadd.f32 0.0, %v457
    %v459 = vpop.f32.mrb[0].mxu0
    %v460 = vadd.f32 0.0, %v459
    %v461 = vpop.f32.mrb[0].mxu0
    %v462 = vadd.f32 0.0, %v461
    %v463 = vpop.f32.mrb[0].mxu0
    %v464 = vadd.f32 0.0, %v463
    %465 = vdwg.mxu0
    %s466 = sld [smem:[#allocation2 + $0x3]]
    %v467 = vstv %s466
    %v468 = vmul.f32 %v467, %v458
    %v469 = vmul.f32 %v467, %v460
    %v470 = vmul.f32 %v467, %v462
    %v471 = vmul.f32 %v467, %v464
    %v472 = vadd.f32 %v417, %v468
    %v473 = vadd.f32 %v418, %v469
    %v474 = vadd.f32 %v419, %v470
    %v475 = vadd.f32 %v420, %v471
    %v476 = vpack.c.bf16 %v462, %v458
    %v477 = vpack.c.bf16 %v464, %v460
    %478 = vmatprep.subr.bf16.mxu0 %v477
    %479 = vmatpush1.bf16.msra.mxu0 %v476
    %480 = vmatprep.subr.bf16.mxu0 0
    %481 = vmatpush1.bf16.msra.mxu0 0
    %482 = vmatprep.subr.bf16.mxu0 0
    %483 = vmatpush1.bf16.msra.mxu0 0
    %484 = vmatprep.subr.bf16.mxu0 0
    %485 = vmatpush1.bf16.msra.mxu0 0
    %486 = vmatprep.subr.bf16.mxu0 0
    %487 = vmatpush1.bf16.msra.mxu0 0
    %488 = vmatprep.subr.bf16.mxu0 0
    %489 = vmatpush1.bf16.msra.mxu0 0
    %490 = vmatprep.subr.bf16.mxu0 0
    %491 = vmatpush1.bf16.msra.mxu0 0
    %492 = vmatprep.subr.bf16.mxu0 0
    %493 = vmatpush1.bf16.msra.mxu0 0
    %494 = vmatprep.subr.bf16.mxu0 0
    %495 = vmatpush1.bf16.msra.mxu0 0
    %496 = vmatprep.subr.bf16.mxu0 0
    %497 = vmatpush1.bf16.msra.mxu0 0
    %498 = vmatprep.subr.bf16.mxu0 0
    %499 = vmatpush1.bf16.msra.mxu0 0
    %500 = vmatprep.subr.bf16.mxu0 0
    %501 = vmatpush1.bf16.msra.mxu0 0
    %502 = vmatprep.subr.bf16.mxu0 0
    %503 = vmatpush1.bf16.msra.mxu0 0
    %504 = vmatprep.subr.bf16.mxu0 0
    %505 = vmatpush1.bf16.msra.mxu0 0
    %506 = vmatprep.subr.bf16.mxu0 0
    %507 = vmatpush1.bf16.msra.mxu0 0
    %508 = vmatprep.subr.bf16.mxu0 0
    %509 = vmatpush1.bf16.msra.mxu0 0
    %510 = vmatprep.mubr.bf16.mxu0 0
    %511 = vmatmul.mubr.bf16.gmra.mrb[0].mxu0 %v76
    %v512 = vpop.f32.mrb[0].mxu0
    %v513 = vadd.f32 0.0, %v512
    %v514 = vpop.f32.mrb[0].mxu0
    %v515 = vadd.f32 0.0, %v514
    %v516 = vpop.f32.mrb[0].mxu0
    %v517 = vadd.f32 0.0, %v516
    %v518 = vpop.f32.mrb[0].mxu0
    %v519 = vadd.f32 0.0, %v518
    %520 = vdwg.mxu0
    %s521 = sld [smem:[#allocation2 + $0x4]]
    %v522 = vstv %s521
    %v523 = vmul.f32 %v522, %v513
    %v524 = vmul.f32 %v522, %v515
    %v525 = vmul.f32 %v522, %v517
    %v526 = vmul.f32 %v522, %v519
    %v527 = vadd.f32 %v472, %v523
    %v528 = vadd.f32 %v473, %v524
    %v529 = vadd.f32 %v474, %v525
    %v530 = vadd.f32 %v475, %v526
    %s531 = scalar_lea.vmem [#allocation9], 32
    %532 = vst [vmem:[%s531] sm:$0xff] %v527
    %533 = vst [vmem:[%s531 + $0x8] sm:$0xff] %v528
    %534 = vst [vmem:[%s531 + $0x10] sm:$0xff] %v529
    %535 = vst [vmem:[%s531 + $0x18] sm:$0xff] %v530
    // Predicated region
    $region26: #{tpu_custom_call.1} parent=1 // pred_check
      _
    $region27: #{tpu_custom_call.1} parent=1 // pred_check_branch
      %537 = sbr.rel (0) target = $region29
    $region28: #{tpu_custom_call.1} parent=1 // pred_region
      %s539 = ssub.s32 1024, 1024
      %540 = vsyncadd [#allocation4], %s539
      %s541 = sshll.u32 [#allocation9], 4
      %s542 = int_to_ptr.vmem [resolvable:$true] %s541
      %547 = dma.vmem_to_hbm [thread:$0]  %s542, 1024, %s3, [#allocation4], 256, 256, 16
    $region29: #{tpu_custom_call.1} parent=1 // pred_fallthru
      _
    // Predicated region
    $region30: #{tpu_custom_call.1} parent=1 // pred_check
      _
    $region31: #{tpu_custom_call.1} parent=1 // pred_check_branch
      %549 = sbr.rel (0) target = $region33
    $region32: #{tpu_custom_call.1} parent=1 // pred_region
      %550 = dma.done [#allocation4], 1024
    $region33: #{tpu_custom_call.1} parent=1 // pred_fallthru
      _
    %551 = vsyncpa [#allocation3], 1
    %552 = vsyncpa [#allocation8], 1
    %553 = vsyncpa [#allocation4], 1
    %554 = vsyncpa [#allocation5], 1

</llo_original>
